<compile_context>
chip_gen: v7x
topology: tpu7x:2x2x1
jax: 0.10.0
libtpu: 0.0.40
codegen_flags: <defaults>
</compile_context>

<pallas_src>
import math

import jax
import jax.numpy as jnp
from jax.experimental import pallas as pl
from jax.experimental.pallas import tpu as pltpu

_HID = 128   # MLP hidden width (from the PyTorch module: [D, 128, 128, obs])


# ------------------------------ Kernel ---------------------------------------
def decoder_kernel(o_ref, a_ref, z_ref,
                   w1o_ref, w1a_ref, w1z_ref, b1_ref,
                   w2_ref, b2_ref, w3_ref, b3_ref,
                   out_ref):
    # Layer 1: split matmul == Linear over cat(o, a, z).  bf16 MXU inputs,
    # f32 accumulation; bias add and ReLU in f32.
    ob = o_ref[...].astype(jnp.bfloat16)
    ab = a_ref[...].astype(jnp.bfloat16)
    zb = z_ref[...].astype(jnp.bfloat16)
    h1 = (jnp.dot(ob, w1o_ref[...], preferred_element_type=jnp.float32)
          + jnp.dot(ab, w1a_ref[...], preferred_element_type=jnp.float32)
          + jnp.dot(zb, w1z_ref[...], preferred_element_type=jnp.float32)
          + b1_ref[...])
    h1 = jnp.maximum(h1, 0.0).astype(jnp.bfloat16)

    # Layer 2.
    h2 = jnp.dot(h1, w2_ref[...], preferred_element_type=jnp.float32) + b2_ref[...]
    h2 = jnp.maximum(h2, 0.0).astype(jnp.bfloat16)

    # Layer 3 (output padded to a multiple of 128 lanes -> unmasked stores).
    out_ref[...] = (jnp.dot(h2, w3_ref[...], preferred_element_type=jnp.float32)
                    + b3_ref[...])


# ------------------------------ Wrapper ---------------------------------------
def decoder_forward(o, a, z, kparams, *, tm=512):
    """o: (B,T,obs), a: (B,T,act), z: (B,T,latent) -> (B,T,obs)."""
    B, T, obs = o.shape
    act = a.shape[2]
    lat = z.shape[2]
    N = B * T
    out_pad = kparams["b3"].shape[1]   # padded last-layer width (multiple of 128)

    o2 = o.reshape(N, obs)
    a2 = a.reshape(N, act)
    z2 = z.reshape(N, lat)

    # Row tile: multiple of 8 (sublane), no bigger than the padded row count.
    tm = min(tm, 8 * pl.cdiv(N, 8))
    num_tiles = pl.cdiv(N, tm)
    n_pad = num_tiles * tm
    if n_pad != N:
        pad = ((0, n_pad - N), (0, 0))
        o2 = jnp.pad(o2, pad)
        a2 = jnp.pad(a2, pad)
        z2 = jnp.pad(z2, pad)

    def row_spec(feat):
        return pl.BlockSpec((tm, feat), lambda i: (i, 0))

    def rep_spec(arr):          # whole (small) weight, same block every step
        return pl.BlockSpec(arr.shape, lambda i: (0, 0))

    out = pl.pallas_call(
        decoder_kernel,
        out_shape=jax.ShapeDtypeStruct((n_pad, out_pad), jnp.float32),
        grid=(num_tiles,),
        in_specs=[row_spec(obs), row_spec(act), row_spec(lat),
                  rep_spec(kparams["w1_o"]), rep_spec(kparams["w1_a"]),
                  rep_spec(kparams["w1_z"]), rep_spec(kparams["b1"]),
                  rep_spec(kparams["w2"]), rep_spec(kparams["b2"]),
                  rep_spec(kparams["w3"]), rep_spec(kparams["b3"])],
        out_specs=pl.BlockSpec((tm, out_pad), lambda i: (i, 0)),
        compiler_params=pltpu.CompilerParams(
            dimension_semantics=("parallel",),
            vmem_limit_bytes=32 * 1024 * 1024),
    )(o2, a2, z2,
      kparams["w1_o"], kparams["w1_a"], kparams["w1_z"], kparams["b1"],
      kparams["w2"], kparams["b2"], kparams["w3"], kparams["b3"])

    return out[:N, :obs].reshape(B, T, obs)


# --------------------------- Parameters ---------------------------------------
def _xavier_uniform(key, fan_in, fan_out):
    std = math.sqrt(2.0 / (fan_in + fan_out))
    a = math.sqrt(3.0) * std
    return jax.random.uniform(key, (fan_in, fan_out), jnp.float32, -a, a)


def init_params(key, obs, act, lat):
    """f32 reference parameters, stored (in, out); biases zero (Xavier())."""
    d_in = obs + act + lat
    k1, k2, k3 = jax.random.split(key, 3)
    return {
        "w1": _xavier_uniform(k1, d_in, _HID),
        "b1": jnp.zeros((_HID,), jnp.float32),
        "w2": _xavier_uniform(k2, _HID, _HID),
        "b2": jnp.zeros((_HID,), jnp.float32),
        "w3": _xavier_uniform(k3, _HID, obs),
        "b3": jnp.zeros((obs,), jnp.float32),
    }


def prepare_kernel_params(params, obs, act):
    """Split W1 by concat segment (o|a|z order, matching torch.cat((o,a,z),2)),
    cast matmul weights to bf16, pad the last layer to a multiple of 128
    output lanes for lane-dense stores."""
    w1 = params["w1"]
    w3 = params["w3"]
    out_w = w3.shape[1]
    out_pad = 128 * pl.cdiv(out_w, 128)
    w3p = jnp.pad(w3, ((0, 0), (0, out_pad - out_w)))
    b3p = jnp.pad(params["b3"], ((0, out_pad - out_w),))
    return {
        "w1_o": w1[:obs].astype(jnp.bfloat16),
        "w1_a": w1[obs:obs + act].astype(jnp.bfloat16),
        "w1_z": w1[obs + act:].astype(jnp.bfloat16),
        "b1": params["b1"].reshape(1, _HID),
        "w2": params["w2"].astype(jnp.bfloat16),
        "b2": params["b2"].reshape(1, _HID),
        "w3": w3p.astype(jnp.bfloat16),
        "b3": b3p.reshape(1, out_pad),
    }


def decoder_reference(o, a, z, params):
    """Pure-JAX f32 reference of the PyTorch Decoder.forward."""
    x = jnp.concatenate([o, a, z], axis=2)
    h1 = jnp.maximum(x @ params["w1"] + params["b1"], 0.0)
    h2 = jnp.maximum(h1 @ params["w2"] + params["b2"], 0.0)
    return h2 @ params["w3"] + params["b3"]


# ------------------------------- Main ------------------------------------------
if __name__ == "__main__":
    key = jax.random.PRNGKey(0)
    B, T = 2, 8
    obs, act, lat = 6, 3, 8

    k_o, k_a, k_z, k_p = jax.random.split(key, 4)
    o = jax.random.normal(k_o, (B, T, obs), jnp.float32)
    a = jax.random.normal(k_a, (B, T, act), jnp.float32)
    z = jax.random.normal(k_z, (B, T, lat), jnp.float32)

    params = init_params(k_p, obs, act, lat)
    kparams = prepare_kernel_params(params, obs, act)

    # tm=8 exercises the multi-tile grid path even at this tiny size;
    # production callers keep the default tm=512 (per-tile VMEM < 1 MiB,
    # fits v7x's 64 MiB VMEM with large headroom).
    recon = decoder_forward(o, a, z, kparams, tm=8)
    jax.block_until_ready(recon)

    assert recon.shape == (B, T, obs)
    assert bool(jnp.all(jnp.isfinite(recon)))

    ref = decoder_reference(o, a, z, params)
    max_err = float(jnp.max(jnp.abs(recon - ref)))
    assert max_err < 5e-2, f"max abs error vs f32 reference: {max_err}"

    print("KERNEL_OK")
</pallas_src>

<mosaic_0001>
module attributes {stable_mosaic.version = 11 : i64} {
  func.func @decoder_kernel(%arg0: i32, %arg1: memref<8x6xf32, #tpu.memory_space<vmem>>, %arg2: memref<8x3xf32, #tpu.memory_space<vmem>>, %arg3: memref<8x8xf32, #tpu.memory_space<vmem>>, %arg4: memref<6x128xbf16, #tpu.memory_space<vmem>>, %arg5: memref<3x128xbf16, #tpu.memory_space<vmem>>, %arg6: memref<8x128xbf16, #tpu.memory_space<vmem>>, %arg7: memref<1x128xf32, #tpu.memory_space<vmem>>, %arg8: memref<128x128xbf16, #tpu.memory_space<vmem>>, %arg9: memref<1x128xf32, #tpu.memory_space<vmem>>, %arg10: memref<128x128xbf16, #tpu.memory_space<vmem>>, %arg11: memref<1x128xf32, #tpu.memory_space<vmem>>, %arg12: memref<8x128xf32, #tpu.memory_space<vmem>>) attributes {dimension_semantics = [#tpu.dimension_semantics<parallel>], iteration_bounds = array<i64: 2>, scalar_prefetch = 0 : i64, scratch_operands = 0 : i64, tpu.core_type = #tpu.core_type<tc>, window_params = [{transform_indices = @transform_0, window_bounds = array<i64: 8, 6>}, {transform_indices = @transform_1, window_bounds = array<i64: 8, 3>}, {transform_indices = @transform_2, window_bounds = array<i64: 8, 8>}, {pipeline_mode = #tpu.pipeline_mode<synchronous>, transform_indices = @transform_3, window_bounds = array<i64: 6, 128>}, {pipeline_mode = #tpu.pipeline_mode<synchronous>, transform_indices = @transform_4, window_bounds = array<i64: 3, 128>}, {pipeline_mode = #tpu.pipeline_mode<synchronous>, transform_indices = @transform_5, window_bounds = array<i64: 8, 128>}, {pipeline_mode = #tpu.pipeline_mode<synchronous>, transform_indices = @transform_6, window_bounds = array<i64: 1, 128>}, {pipeline_mode = #tpu.pipeline_mode<synchronous>, transform_indices = @transform_7, window_bounds = array<i64: 128, 128>}, {pipeline_mode = #tpu.pipeline_mode<synchronous>, transform_indices = @transform_8, window_bounds = array<i64: 1, 128>}, {pipeline_mode = #tpu.pipeline_mode<synchronous>, transform_indices = @transform_9, window_bounds = array<i64: 128, 128>}, {pipeline_mode = #tpu.pipeline_mode<synchronous>, transform_indices = @transform_10, window_bounds = array<i64: 1, 128>}, {transform_indices = @transform_11, window_bounds = array<i64: 8, 128>}]} {
    %c0 = arith.constant 0 : index
    %c0_0 = arith.constant 0 : index
    %0 = vector.load %arg1[%c0, %c0_0] : memref<8x6xf32, #tpu.memory_space<vmem>>, vector<8x6xf32>
    %1 = arith.truncf %0 : vector<8x6xf32> to vector<8x6xbf16>
    %c0_1 = arith.constant 0 : index
    %c0_2 = arith.constant 0 : index
    %2 = vector.load %arg2[%c0_1, %c0_2] : memref<8x3xf32, #tpu.memory_space<vmem>>, vector<8x3xf32>
    %3 = arith.truncf %2 : vector<8x3xf32> to vector<8x3xbf16>
    %c0_3 = arith.constant 0 : index
    %c0_4 = arith.constant 0 : index
    %4 = vector.load %arg3[%c0_3, %c0_4] : memref<8x8xf32, #tpu.memory_space<vmem>>, vector<8x8xf32>
    %5 = arith.truncf %4 : vector<8x8xf32> to vector<8x8xbf16>
    %c0_5 = arith.constant 0 : index
    %c0_6 = arith.constant 0 : index
    %6 = vector.load %arg4[%c0_5, %c0_6] : memref<6x128xbf16, #tpu.memory_space<vmem>>, vector<6x128xbf16>
    %cst = arith.constant dense<0.000000e+00> : vector<8x128xf32>
    %7 = tpu.matmul %1, %6, %cst {dimension_numbers = #tpu.dot_dimension_numbers<[1], [0], [0], [1], [0, 0, 1, 1], [], []>} : vector<8x6xbf16>, vector<6x128xbf16>, vector<8x128xf32> -> vector<8x128xf32>
    %c0_7 = arith.constant 0 : index
    %c0_8 = arith.constant 0 : index
    %8 = vector.load %arg5[%c0_7, %c0_8] : memref<3x128xbf16, #tpu.memory_space<vmem>>, vector<3x128xbf16>
    %cst_9 = arith.constant dense<0.000000e+00> : vector<8x128xf32>
    %9 = tpu.matmul %3, %8, %cst_9 {dimension_numbers = #tpu.dot_dimension_numbers<[1], [0], [0], [1], [0, 0, 1, 1], [], []>} : vector<8x3xbf16>, vector<3x128xbf16>, vector<8x128xf32> -> vector<8x128xf32>
    %10 = arith.addf %7, %9 : vector<8x128xf32>
    %c0_10 = arith.constant 0 : index
    %c0_11 = arith.constant 0 : index
    %11 = vector.load %arg6[%c0_10, %c0_11] : memref<8x128xbf16, #tpu.memory_space<vmem>>, vector<8x128xbf16>
    %cst_12 = arith.constant dense<0.000000e+00> : vector<8x128xf32>
    %12 = tpu.matmul %5, %11, %cst_12 {dimension_numbers = #tpu.dot_dimension_numbers<[1], [0], [0], [1], [0, 0, 1, 1], [], []>} : vector<8x8xbf16>, vector<8x128xbf16>, vector<8x128xf32> -> vector<8x128xf32>
    %13 = arith.addf %10, %12 : vector<8x128xf32>
    %c0_13 = arith.constant 0 : index
    %c0_14 = arith.constant 0 : index
    %14 = vector.load %arg7[%c0_13, %c0_14] : memref<1x128xf32, #tpu.memory_space<vmem>>, vector<1x128xf32>
    %15 = vector.broadcast %14 : vector<1x128xf32> to vector<8x128xf32>
    %16 = arith.addf %13, %15 : vector<8x128xf32>
    %cst_15 = arith.constant 0.000000e+00 : f32
    %17 = vector.broadcast %cst_15 : f32 to vector<8x128xf32>
    %18 = arith.maximumf %16, %17 : vector<8x128xf32>
    %19 = arith.truncf %18 : vector<8x128xf32> to vector<8x128xbf16>
    %c0_16 = arith.constant 0 : index
    %c0_17 = arith.constant 0 : index
    %20 = vector.load %arg8[%c0_16, %c0_17] : memref<128x128xbf16, #tpu.memory_space<vmem>>, vector<128x128xbf16>
    %cst_18 = arith.constant dense<0.000000e+00> : vector<8x128xf32>
    %21 = tpu.matmul %19, %20, %cst_18 {dimension_numbers = #tpu.dot_dimension_numbers<[1], [0], [0], [1], [0, 0, 1, 1], [], []>} : vector<8x128xbf16>, vector<128x128xbf16>, vector<8x128xf32> -> vector<8x128xf32>
    %c0_19 = arith.constant 0 : index
    %c0_20 = arith.constant 0 : index
    %22 = vector.load %arg9[%c0_19, %c0_20] : memref<1x128xf32, #tpu.memory_space<vmem>>, vector<1x128xf32>
    %23 = vector.broadcast %22 : vector<1x128xf32> to vector<8x128xf32>
    %24 = arith.addf %21, %23 : vector<8x128xf32>
    %cst_21 = arith.constant 0.000000e+00 : f32
    %25 = vector.broadcast %cst_21 : f32 to vector<8x128xf32>
    %26 = arith.maximumf %24, %25 : vector<8x128xf32>
    %27 = arith.truncf %26 : vector<8x128xf32> to vector<8x128xbf16>
    %c0_22 = arith.constant 0 : index
    %c0_23 = arith.constant 0 : index
    %28 = vector.load %arg10[%c0_22, %c0_23] : memref<128x128xbf16, #tpu.memory_space<vmem>>, vector<128x128xbf16>
    %cst_24 = arith.constant dense<0.000000e+00> : vector<8x128xf32>
    %29 = tpu.matmul %27, %28, %cst_24 {dimension_numbers = #tpu.dot_dimension_numbers<[1], [0], [0], [1], [0, 0, 1, 1], [], []>} : vector<8x128xbf16>, vector<128x128xbf16>, vector<8x128xf32> -> vector<8x128xf32>
    %c0_25 = arith.constant 0 : index
    %c0_26 = arith.constant 0 : index
    %30 = vector.load %arg11[%c0_25, %c0_26] : memref<1x128xf32, #tpu.memory_space<vmem>>, vector<1x128xf32>
    %31 = vector.broadcast %30 : vector<1x128xf32> to vector<8x128xf32>
    %32 = arith.addf %29, %31 : vector<8x128xf32>
    %c0_27 = arith.constant 0 : index
    %c0_28 = arith.constant 0 : index
    %33 = vector.load %arg12[%c0_27, %c0_28] : memref<8x128xf32, #tpu.memory_space<vmem>>, vector<8x128xf32>
    tpu.vector_store %arg12[%c0_27, %c0_28], %32 {strides = array<i32>} : memref<8x128xf32, #tpu.memory_space<vmem>>, vector<8x128xf32>,
    return
  }
  func.func @transform_0(%arg0: i32) -> (i32, i32) {
    %c0_i32 = arith.constant 0 : i32
    %c0_i32_0 = arith.constant 0 : i32
    return %arg0, %c0_i32 : i32, i32
  }
  func.func @transform_1(%arg0: i32) -> (i32, i32) {
    %c0_i32 = arith.constant 0 : i32
    %c0_i32_0 = arith.constant 0 : i32
    return %arg0, %c0_i32 : i32, i32
  }
  func.func @transform_2(%arg0: i32) -> (i32, i32) {
    %c0_i32 = arith.constant 0 : i32
    %c0_i32_0 = arith.constant 0 : i32
    return %arg0, %c0_i32 : i32, i32
  }
  func.func @transform_3(%arg0: i32) -> (i32, i32) {
    %c0_i32 = arith.constant 0 : i32
    %c0_i32_0 = arith.constant 0 : i32
    %c0_i32_1 = arith.constant 0 : i32
    return %c0_i32, %c0_i32_0 : i32, i32
  }
  func.func @transform_4(%arg0: i32) -> (i32, i32) {
    %c0_i32 = arith.constant 0 : i32
    %c0_i32_0 = arith.constant 0 : i32
    %c0_i32_1 = arith.constant 0 : i32
    return %c0_i32, %c0_i32_0 : i32, i32
  }
  func.func @transform_5(%arg0: i32) -> (i32, i32) {
    %c0_i32 = arith.constant 0 : i32
    %c0_i32_0 = arith.constant 0 : i32
    %c0_i32_1 = arith.constant 0 : i32
    return %c0_i32, %c0_i32_0 : i32, i32
  }
  func.func @transform_6(%arg0: i32) -> (i32, i32) {
    %c0_i32 = arith.constant 0 : i32
    %c0_i32_0 = arith.constant 0 : i32
    %c0_i32_1 = arith.constant 0 : i32
    return %c0_i32, %c0_i32_0 : i32, i32
  }
  func.func @transform_7(%arg0: i32) -> (i32, i32) {
    %c0_i32 = arith.constant 0 : i32
    %c0_i32_0 = arith.constant 0 : i32
    %c0_i32_1 = arith.constant 0 : i32
    return %c0_i32, %c0_i32_0 : i32, i32
  }
  func.func @transform_8(%arg0: i32) -> (i32, i32) {
    %c0_i32 = arith.constant 0 : i32
    %c0_i32_0 = arith.constant 0 : i32
    %c0_i32_1 = arith.constant 0 : i32
    return %c0_i32, %c0_i32_0 : i32, i32
  }
  func.func @transform_9(%arg0: i32) -> (i32, i32) {
    %c0_i32 = arith.constant 0 : i32
    %c0_i32_0 = arith.constant 0 : i32
    %c0_i32_1 = arith.constant 0 : i32
    return %c0_i32, %c0_i32_0 : i32, i32
  }
  func.func @transform_10(%arg0: i32) -> (i32, i32) {
    %c0_i32 = arith.constant 0 : i32
    %c0_i32_0 = arith.constant 0 : i32
    %c0_i32_1 = arith.constant 0 : i32
    return %c0_i32, %c0_i32_0 : i32, i32
  }
  func.func @transform_11(%arg0: i32) -> (i32, i32) {
    %c0_i32 = arith.constant 0 : i32
    %c0_i32_0 = arith.constant 0 : i32
    return %arg0, %c0_i32 : i32, i32
  }
}

</mosaic_0001>

<llo_original>
// kernel: tpu_custom_call.1
$region0: #{tpu_custom_call.1}
  #allocation0 [shape = 'u32[]', space=smem, size = 0x4, offset = 0x4, fixed_abs, tag = 'smem constant byte address 0x4 - core index']
  #allocation1 [shape = 'u32[144,128]{1,0:T(1,128)}', space=vmem, size = 0x12000, scoped, tag = 'internal scratch']
  %s0 = inlined_call_operand.vmem [shape: f32[16,6], index: 0, kind: input, shape index: {}]
  %s1 = inlined_call_operand.vmem [shape: f32[16,3], index: 1, kind: input, shape index: {}]
  %s2 = inlined_call_operand.vmem [shape: f32[16,8], index: 2, kind: input, shape index: {}]
  %s3 = inlined_call_operand.vmem [shape: bf16[6,128], index: 3, kind: input, shape index: {}]
  %s4 = inlined_call_operand.vmem [shape: bf16[3,128], index: 4, kind: input, shape index: {}]
  %s5 = inlined_call_operand.vmem [shape: bf16[8,128], index: 5, kind: input, shape index: {}]
  %s6 = inlined_call_operand.vmem [shape: f32[1,128], index: 6, kind: input, shape index: {}]
  %s7 = inlined_call_operand.vmem [shape: bf16[128,128], index: 7, kind: input, shape index: {}]
  %s8 = inlined_call_operand.vmem [shape: f32[1,128], index: 8, kind: input, shape index: {}]
  %s9 = inlined_call_operand.hbm [shape: bf16[128,128], index: 9, kind: input, shape index: {}]
  %s10 = inlined_call_operand.vmem [shape: f32[1,128], index: 10, kind: input, shape index: {}]
  %s11 = inlined_call_operand.hbm [shape: f32[16,128], index: 11, kind: output, shape index: {}]
  %s12 = sld [smem:[#allocation0]]
  $region81: #{tpu_custom_call.1} parent=0
    _
  %s14 = ssub.s32 1, %s12
  %s15 = scalar_select 0, %s14, %s12
  $region1: #{tpu_custom_call.1} parent=0
    #allocation2 [shape = 'u8[32768]{0}', space=vmem, size = 0x8000, scoped, tag = 'input window, operand 9, single buffered']
    #allocation3 [shape = 's32[2]{0}', space=sflag, size = 0x8, scoped, tag = 'scoped memory for tpu_custom_call.1']
    #allocation4 [shape = 's32[2]{0}', space=sflag, size = 0x8, scoped, tag = 'scoped memory for tpu_custom_call.1']
    #allocation5 [shape = 'u8[8192]{0}', space=vmem, size = 0x2000, scoped, tag = 'output window, operand 0']
    %16 = vsyncpa [#allocation3], 0
    %17 = vsyncpa [#allocation4], 0
    %s18 = scalar_lea.sflag [#allocation4], 1
    %19 = vsyncpa %s18, 0
    loop: start=0, step=1, limit=4
    $region2: #{tpu_custom_call.1} parent=1 // loop_pre_header
      _
    $region3: #{tpu_custom_call.1} parent=1 // loop_header
      %s21 = sphi 0, %s25
      %p22 = scmp.ge.s32.totalorder %s21, 4
      %s31 = sphi 0, %s33
      %s34 = sphi 0, %s31
      %s35 = sphi 0, %s34
      %s51 = sphi 0, %s35
      %s57 = sphi 0, %s59
      %s60 = sphi 0, %s57
      %s61 = sphi 0, %s60
      %s77 = sphi 0, %s61
      %s83 = sphi 0, %s85
      %s86 = sphi 0, %s83
      %s87 = sphi 0, %s86
      %s103 = sphi 0, %s87
      %s107 = sphi 0, %s107
      %s109 = sphi 0, %s107
      %s110 = sphi 0, %s109
      %s124 = sphi 0, %s110
      %s128 = sphi 0, %s128
      %s130 = sphi 0, %s128
      %s131 = sphi 0, %s130
      %s145 = sphi 0, %s131
      %s149 = sphi 0, %s149
      %s151 = sphi 0, %s149
      %s152 = sphi 0, %s151
      %s166 = sphi 0, %s152
      %s170 = sphi 0, %s170
      %s172 = sphi 0, %s170
      %s173 = sphi 0, %s172
      %s187 = sphi 0, %s173
      %s191 = sphi 0, %s191
      %s193 = sphi 0, %s191
      %s194 = sphi 0, %s193
      %s208 = sphi 0, %s194
      %s212 = sphi 0, %s212
      %s214 = sphi 0, %s212
      %s215 = sphi 0, %s214
      %s229 = sphi 0, %s215
      %s233 = sphi 0, %s233
      %s235 = sphi 0, %s233
      %s236 = sphi 0, %s235
      %s250 = sphi 0, %s236
      %s254 = sphi 0, %s254
      %s256 = sphi 0, %s254
      %s257 = sphi 0, %s256
      %s271 = sphi 0, %s257
      %s277 = sphi 0, %s279
      %s280 = sphi 0, %s277
      %s281 = sphi 0, %s280
      %s297 = sphi 0, %s281
    $region4: #{tpu_custom_call.1} parent=1 // loop_header_branch
      %24 = sbr.rel (%p22) target = $region8
    $region5: #{tpu_custom_call.1} parent=1 // loop_body
      %s26 = ssub.s32 %s21, 1
      %s27 = ssub.s32 %s21, 2
      %s28 = sadd.s32 %s21, 1
      %s29 = ssub.s32 %s21, %s28
      %p30 = scmp.eq.s32.totalorder %s29, 0
      %s32 = sadd.s32 %s31, 1
      %s33 = scalar_select %p30, %s31, %s32
      %p36 = pneg %p30
      %p37 = scmp.eq.s32.totalorder %s21, 1
      %p38 = por %p36, %p37
      %p39 = scmp.ne.s32.totalorder %s31, %s34
      %p40 = scmp.eq.s32.totalorder %s21, 0
      %p41 = por %p39, %p40
      %p42 = scmp.ne.s32.totalorder %s31, %s34
      %p43 = scmp.eq.s32.totalorder %s26, 1
      %p44 = por %p42, %p43
      %p45 = scmp.ne.s32.totalorder %s34, %s35
      %p46 = scmp.eq.s32.totalorder %s26, 0
      %p47 = por %p45, %p46
      %p48 = scmp.ne.s32.totalorder %s34, %s35
      %p49 = scmp.eq.s32.totalorder %s27, 1
      %p50 = por %p48, %p49
      %p52 = scmp.ne.s32.totalorder %s35, %s51
      %p53 = scmp.eq.s32.totalorder %s27, 0
      %p54 = por %p52, %p53
      %s55 = ssub.s32 %s21, %s28
      %p56 = scmp.eq.s32.totalorder %s55, 0
      %s58 = sadd.s32 %s57, 1
      %s59 = scalar_select %p56, %s57, %s58
      %p62 = pneg %p56
      %p63 = scmp.eq.s32.totalorder %s21, 1
      %p64 = por %p62, %p63
      %p65 = scmp.ne.s32.totalorder %s57, %s60
      %p66 = scmp.eq.s32.totalorder %s21, 0
      %p67 = por %p65, %p66
      %p68 = scmp.ne.s32.totalorder %s57, %s60
      %p69 = scmp.eq.s32.totalorder %s26, 1
      %p70 = por %p68, %p69
      %p71 = scmp.ne.s32.totalorder %s60, %s61
      %p72 = scmp.eq.s32.totalorder %s26, 0
      %p73 = por %p71, %p72
      %p74 = scmp.ne.s32.totalorder %s60, %s61
      %p75 = scmp.eq.s32.totalorder %s27, 1
      %p76 = por %p74, %p75
      %p78 = scmp.ne.s32.totalorder %s61, %s77
      %p79 = scmp.eq.s32.totalorder %s27, 0
      %p80 = por %p78, %p79
      %s81 = ssub.s32 %s21, %s28
      %p82 = scmp.eq.s32.totalorder %s81, 0
      %s84 = sadd.s32 %s83, 1
      %s85 = scalar_select %p82, %s83, %s84
      %p88 = pneg %p82
      %p89 = scmp.eq.s32.totalorder %s21, 1
      %p90 = por %p88, %p89
      %p91 = scmp.ne.s32.totalorder %s83, %s86
      %p92 = scmp.eq.s32.totalorder %s21, 0
      %p93 = por %p91, %p92
      %p94 = scmp.ne.s32.totalorder %s83, %s86
      %p95 = scmp.eq.s32.totalorder %s26, 1
      %p96 = por %p94, %p95
      %p97 = scmp.ne.s32.totalorder %s86, %s87
      %p98 = scmp.eq.s32.totalorder %s26, 0
      %p99 = por %p97, %p98
      %p100 = scmp.ne.s32.totalorder %s86, %s87
      %p101 = scmp.eq.s32.totalorder %s27, 1
      %p102 = por %p100, %p101
      %p104 = scmp.ne.s32.totalorder %s87, %s103
      %p105 = scmp.eq.s32.totalorder %s27, 0
      %p106 = por %p104, %p105
      %s108 = sadd.s32 %s107, 1
      %p111 = scmp.eq.s32.totalorder %s21, 1
      %p112 = scmp.ne.s32.totalorder %s107, %s109
      %p113 = scmp.eq.s32.totalorder %s21, 0
      %p114 = por %p112, %p113
      %p115 = scmp.ne.s32.totalorder %s107, %s109
      %p116 = scmp.eq.s32.totalorder %s26, 1
      %p117 = por %p115, %p116
      %p118 = scmp.ne.s32.totalorder %s109, %s110
      %p119 = scmp.eq.s32.totalorder %s26, 0
      %p120 = por %p118, %p119
      %p121 = scmp.ne.s32.totalorder %s109, %s110
      %p122 = scmp.eq.s32.totalorder %s27, 1
      %p123 = por %p121, %p122
      %p125 = scmp.ne.s32.totalorder %s110, %s124
      %p126 = scmp.eq.s32.totalorder %s27, 0
      %p127 = por %p125, %p126
      %s129 = sadd.s32 %s128, 1
      %p132 = scmp.eq.s32.totalorder %s21, 1
      %p133 = scmp.ne.s32.totalorder %s128, %s130
      %p134 = scmp.eq.s32.totalorder %s21, 0
      %p135 = por %p133, %p134
      %p136 = scmp.ne.s32.totalorder %s128, %s130
      %p137 = scmp.eq.s32.totalorder %s26, 1
      %p138 = por %p136, %p137
      %p139 = scmp.ne.s32.totalorder %s130, %s131
      %p140 = scmp.eq.s32.totalorder %s26, 0
      %p141 = por %p139, %p140
      %p142 = scmp.ne.s32.totalorder %s130, %s131
      %p143 = scmp.eq.s32.totalorder %s27, 1
      %p144 = por %p142, %p143
      %p146 = scmp.ne.s32.totalorder %s131, %s145
      %p147 = scmp.eq.s32.totalorder %s27, 0
      %p148 = por %p146, %p147
      %s150 = sadd.s32 %s149, 1
      %p153 = scmp.eq.s32.totalorder %s21, 1
      %p154 = scmp.ne.s32.totalorder %s149, %s151
      %p155 = scmp.eq.s32.totalorder %s21, 0
      %p156 = por %p154, %p155
      %p157 = scmp.ne.s32.totalorder %s149, %s151
      %p158 = scmp.eq.s32.totalorder %s26, 1
      %p159 = por %p157, %p158
      %p160 = scmp.ne.s32.totalorder %s151, %s152
      %p161 = scmp.eq.s32.totalorder %s26, 0
      %p162 = por %p160, %p161
      %p163 = scmp.ne.s32.totalorder %s151, %s152
      %p164 = scmp.eq.s32.totalorder %s27, 1
      %p165 = por %p163, %p164
      %p167 = scmp.ne.s32.totalorder %s152, %s166
      %p168 = scmp.eq.s32.totalorder %s27, 0
      %p169 = por %p167, %p168
      %s171 = sadd.s32 %s170, 1
      %p174 = scmp.eq.s32.totalorder %s21, 1
      %p175 = scmp.ne.s32.totalorder %s170, %s172
      %p176 = scmp.eq.s32.totalorder %s21, 0
      %p177 = por %p175, %p176
      %p178 = scmp.ne.s32.totalorder %s170, %s172
      %p179 = scmp.eq.s32.totalorder %s26, 1
      %p180 = por %p178, %p179
      %p181 = scmp.ne.s32.totalorder %s172, %s173
      %p182 = scmp.eq.s32.totalorder %s26, 0
      %p183 = por %p181, %p182
      %p184 = scmp.ne.s32.totalorder %s172, %s173
      %p185 = scmp.eq.s32.totalorder %s27, 1
      %p186 = por %p184, %p185
      %p188 = scmp.ne.s32.totalorder %s173, %s187
      %p189 = scmp.eq.s32.totalorder %s27, 0
      %p190 = por %p188, %p189
      %s192 = sadd.s32 %s191, 1
      %p195 = scmp.eq.s32.totalorder %s21, 1
      %p196 = scmp.ne.s32.totalorder %s191, %s193
      %p197 = scmp.eq.s32.totalorder %s21, 0
      %p198 = por %p196, %p197
      %p199 = scmp.ne.s32.totalorder %s191, %s193
      %p200 = scmp.eq.s32.totalorder %s26, 1
      %p201 = por %p199, %p200
      %p202 = scmp.ne.s32.totalorder %s193, %s194
      %p203 = scmp.eq.s32.totalorder %s26, 0
      %p204 = por %p202, %p203
      %p205 = scmp.ne.s32.totalorder %s193, %s194
      %p206 = scmp.eq.s32.totalorder %s27, 1
      %p207 = por %p205, %p206
      %p209 = scmp.ne.s32.totalorder %s194, %s208
      %p210 = scmp.eq.s32.totalorder %s27, 0
      %p211 = por %p209, %p210
      %s213 = sadd.s32 %s212, 1
      %p216 = scmp.eq.s32.totalorder %s21, 1
      %p217 = scmp.ne.s32.totalorder %s212, %s214
      %p218 = scmp.eq.s32.totalorder %s21, 0
      %p219 = por %p217, %p218
      %p220 = scmp.ne.s32.totalorder %s212, %s214
      %p221 = scmp.eq.s32.totalorder %s26, 1
      %p222 = por %p220, %p221
      %p223 = scmp.ne.s32.totalorder %s214, %s215
      %p224 = scmp.eq.s32.totalorder %s26, 0
      %p225 = por %p223, %p224
      %p226 = scmp.ne.s32.totalorder %s214, %s215
      %p227 = scmp.eq.s32.totalorder %s27, 1
      %p228 = por %p226, %p227
      %p230 = scmp.ne.s32.totalorder %s215, %s229
      %p231 = scmp.eq.s32.totalorder %s27, 0
      %p232 = por %p230, %p231
      %s234 = sadd.s32 %s233, 1
      %p237 = scmp.eq.s32.totalorder %s21, 1
      %p238 = scmp.ne.s32.totalorder %s233, %s235
      %p239 = scmp.eq.s32.totalorder %s21, 0
      %p240 = por %p238, %p239
      %p241 = scmp.ne.s32.totalorder %s233, %s235
      %p242 = scmp.eq.s32.totalorder %s26, 1
      %p243 = por %p241, %p242
      %p244 = scmp.ne.s32.totalorder %s235, %s236
      %p245 = scmp.eq.s32.totalorder %s26, 0
      %p246 = por %p244, %p245
      %p247 = scmp.ne.s32.totalorder %s235, %s236
      %p248 = scmp.eq.s32.totalorder %s27, 1
      %p249 = por %p247, %p248
      %p251 = scmp.ne.s32.totalorder %s236, %s250
      %p252 = scmp.eq.s32.totalorder %s27, 0
      %p253 = por %p251, %p252
      %s255 = sadd.s32 %s254, 1
      %p258 = scmp.eq.s32.totalorder %s21, 1
      %p259 = scmp.ne.s32.totalorder %s254, %s256
      %p260 = scmp.eq.s32.totalorder %s21, 0
      %p261 = por %p259, %p260
      %p262 = scmp.ne.s32.totalorder %s254, %s256
      %p263 = scmp.eq.s32.totalorder %s26, 1
      %p264 = por %p262, %p263
      %p265 = scmp.ne.s32.totalorder %s256, %s257
      %p266 = scmp.eq.s32.totalorder %s26, 0
      %p267 = por %p265, %p266
      %p268 = scmp.ne.s32.totalorder %s256, %s257
      %p269 = scmp.eq.s32.totalorder %s27, 1
      %p270 = por %p268, %p269
      %p272 = scmp.ne.s32.totalorder %s257, %s271
      %p273 = scmp.eq.s32.totalorder %s27, 0
      %p274 = por %p272, %p273
      %s275 = ssub.s32 %s21, %s28
      %p276 = scmp.eq.s32.totalorder %s275, 0
      %s278 = sadd.s32 %s277, 1
      %s279 = scalar_select %p276, %s277, %s278
      %p282 = pneg %p276
      %p283 = scmp.eq.s32.totalorder %s21, 1
      %p284 = por %p282, %p283
      %p285 = scmp.ne.s32.totalorder %s277, %s280
      %p286 = scmp.eq.s32.totalorder %s21, 0
      %p287 = por %p285, %p286
      %p288 = scmp.ne.s32.totalorder %s277, %s280
      %p289 = scmp.eq.s32.totalorder %s26, 1
      %p290 = por %p288, %p289
      %p291 = scmp.ne.s32.totalorder %s280, %s281
      %p292 = scmp.eq.s32.totalorder %s26, 0
      %p293 = por %p291, %p292
      %p294 = scmp.ne.s32.totalorder %s280, %s281
      %p295 = scmp.eq.s32.totalorder %s27, 1
      %p296 = por %p294, %p295
      %p298 = scmp.ne.s32.totalorder %s281, %s297
      %p299 = scmp.eq.s32.totalorder %s27, 0
      %p300 = por %p298, %p299
      %p301 = scmp.le.s32.totalorder 1, %s21
      %p302 = scmp.lt.s32.totalorder %s21, 3
      %p303 = pnand %p301, %p302
      %p304 = pneg %p303
      // Predicated region
      $region9: #{tpu_custom_call.1} parent=5 // pred_check
        _
      $region10: #{tpu_custom_call.1} parent=5 // pred_check_branch
        %306 = sbr.rel (%p303) target = $region12
      $region11: #{tpu_custom_call.1} parent=5 // pred_region
        %s307 = ssub.s32 %s21, 1
        // Predicated region
        $region13: #{tpu_custom_call.1} parent=11 // pred_check
          %p308 = pneg %p120
        $region14: #{tpu_custom_call.1} parent=11 // pred_check_branch
          %310 = sbr.rel (%p308) target = $region16
        $region15: #{tpu_custom_call.1} parent=11 // pred_region
          _
        $region16: #{tpu_custom_call.1} parent=11 // pred_fallthru
          _
        // Predicated region
        $region17: #{tpu_custom_call.1} parent=11 // pred_check
          %p311 = pneg %p141
        $region18: #{tpu_custom_call.1} parent=11 // pred_check_branch
          %313 = sbr.rel (%p311) target = $region20
        $region19: #{tpu_custom_call.1} parent=11 // pred_region
          _
        $region20: #{tpu_custom_call.1} parent=11 // pred_fallthru
          _
        // Predicated region
        $region21: #{tpu_custom_call.1} parent=11 // pred_check
          %p314 = pneg %p162
        $region22: #{tpu_custom_call.1} parent=11 // pred_check_branch
          %316 = sbr.rel (%p314) target = $region24
        $region23: #{tpu_custom_call.1} parent=11 // pred_region
          _
        $region24: #{tpu_custom_call.1} parent=11 // pred_fallthru
          _
        // Predicated region
        $region25: #{tpu_custom_call.1} parent=11 // pred_check
          %p317 = pneg %p183
        $region26: #{tpu_custom_call.1} parent=11 // pred_check_branch
          %319 = sbr.rel (%p317) target = $region28
        $region27: #{tpu_custom_call.1} parent=11 // pred_region
          _
        $region28: #{tpu_custom_call.1} parent=11 // pred_fallthru
          _
        // Predicated region
        $region29: #{tpu_custom_call.1} parent=11 // pred_check
          %p320 = pneg %p204
        $region30: #{tpu_custom_call.1} parent=11 // pred_check_branch
          %322 = sbr.rel (%p320) target = $region32
        $region31: #{tpu_custom_call.1} parent=11 // pred_region
          _
        $region32: #{tpu_custom_call.1} parent=11 // pred_fallthru
          _
        // Predicated region
        $region33: #{tpu_custom_call.1} parent=11 // pred_check
          %p323 = pneg %p225
        $region34: #{tpu_custom_call.1} parent=11 // pred_check_branch
          %325 = sbr.rel (%p323) target = $region36
        $region35: #{tpu_custom_call.1} parent=11 // pred_region
          _
        $region36: #{tpu_custom_call.1} parent=11 // pred_fallthru
          _
        // Predicated region
        $region37: #{tpu_custom_call.1} parent=11 // pred_check
          %p326 = pneg %p246
        $region38: #{tpu_custom_call.1} parent=11 // pred_check_branch
          %328 = sbr.rel (%p326) target = $region40
        $region39: #{tpu_custom_call.1} parent=11 // pred_region
          %s330 = ssub.s32 1024, 1024
          %331 = vsyncadd [#allocation3], %s330
          %s332 = sshll.u32 [#allocation2], 4
          %s333 = int_to_ptr.vmem [resolvable:$true] %s332
          %338 = dma.hbm_to_vmem [thread:$0]  %s9, 1024, %s333, [#allocation3], 64, 64, 4
        $region40: #{tpu_custom_call.1} parent=11 // pred_fallthru
          _
        // Predicated region
        $region41: #{tpu_custom_call.1} parent=11 // pred_check
          %p339 = pneg %p267
        $region42: #{tpu_custom_call.1} parent=11 // pred_check_branch
          %341 = sbr.rel (%p339) target = $region44
        $region43: #{tpu_custom_call.1} parent=11 // pred_region
          _
        $region44: #{tpu_custom_call.1} parent=11 // pred_fallthru
          _
      $region12: #{tpu_custom_call.1} parent=5 // pred_fallthru
        _
      %p342 = scmp.lt.s32.totalorder %s21, 2
      // Predicated region
      $region45: #{tpu_custom_call.1} parent=5 // pred_check
        %p343 = pneg %p342
      $region46: #{tpu_custom_call.1} parent=5 // pred_check_branch
        %345 = sbr.rel (%p343) target = $region48
      $region47: #{tpu_custom_call.1} parent=5 // pred_region
        // Predicated region
        $region49: #{tpu_custom_call.1} parent=47 // pred_check
          %p346 = pneg %p41
        $region50: #{tpu_custom_call.1} parent=47 // pred_check_branch
          %348 = sbr.rel (%p346) target = $region52
        $region51: #{tpu_custom_call.1} parent=47 // pred_region
          %p349 = scmp.lt.s32.totalorder %s21, 1
          %s350 = scalar_select %p349, %s21, 1
          %s351 = smul.addr %s350, 8
          %s352 = scalar_lea.vmem %s0, %s351
        $region52: #{tpu_custom_call.1} parent=47 // pred_fallthru
          _
        // Predicated region
        $region53: #{tpu_custom_call.1} parent=47 // pred_check
          %p353 = pneg %p67
        $region54: #{tpu_custom_call.1} parent=47 // pred_check_branch
          %355 = sbr.rel (%p353) target = $region56
        $region55: #{tpu_custom_call.1} parent=47 // pred_region
          %p356 = scmp.lt.s32.totalorder %s21, 1
          %s357 = scalar_select %p356, %s21, 1
          %s358 = smul.addr %s357, 8
          %s359 = scalar_lea.vmem %s1, %s358
        $region56: #{tpu_custom_call.1} parent=47 // pred_fallthru
          _
        // Predicated region
        $region57: #{tpu_custom_call.1} parent=47 // pred_check
          %p360 = pneg %p93
        $region58: #{tpu_custom_call.1} parent=47 // pred_check_branch
          %362 = sbr.rel (%p360) target = $region60
        $region59: #{tpu_custom_call.1} parent=47 // pred_region
          %p363 = scmp.lt.s32.totalorder %s21, 1
          %s364 = scalar_select %p363, %s21, 1
          %s365 = smul.addr %s364, 8
          %s366 = scalar_lea.vmem %s2, %s365
        $region60: #{tpu_custom_call.1} parent=47 // pred_fallthru
          _
      $region48: #{tpu_custom_call.1} parent=5 // pred_fallthru
        _
      %p367 = scmp.le.s32.totalorder 1, %s21
      %p368 = scmp.lt.s32.totalorder %s21, 3
      %p369 = pnand %p367, %p368
      %p370 = pneg %p369
      // Predicated region
      $region61: #{tpu_custom_call.1} parent=5 // pred_check
        _
      $region62: #{tpu_custom_call.1} parent=5 // pred_check_branch
        %372 = sbr.rel (%p369) target = $region64
      $region63: #{tpu_custom_call.1} parent=5 // pred_region
        %s373 = ssub.s32 %s21, 1
        // Predicated region
        $region65: #{tpu_custom_call.1} parent=63 // pred_check
          %p374 = pneg %p246
        $region66: #{tpu_custom_call.1} parent=63 // pred_check_branch
          %376 = sbr.rel (%p374) target = $region68
        $region67: #{tpu_custom_call.1} parent=63 // pred_region
          %377 = dma.done [#allocation3], 1024
        $region68: #{tpu_custom_call.1} parent=63 // pred_fallthru
          _
        %p378 = scmp.lt.s32.totalorder %s26, 1
        %s379 = scalar_select %p378, %s26, 1
        %s380 = smul.addr %s379, 8
        %s381 = scalar_lea.vmem %s0, %s380
        %p382 = pneg %p47
        %p383 = pneg %p44
        %p384 = scmp.lt.s32.totalorder %s26, 1
        %s385 = scalar_select %p384, %s26, 1
        %s386 = smul.addr %s385, 8
        %s387 = scalar_lea.vmem %s1, %s386
        %p388 = pneg %p73
        %p389 = pneg %p70
        %p390 = scmp.lt.s32.totalorder %s26, 1
        %s391 = scalar_select %p390, %s26, 1
        %s392 = smul.addr %s391, 8
        %s393 = scalar_lea.vmem %s2, %s392
        %p394 = pneg %p99
        %p395 = pneg %p96
        %p396 = pneg %p120
        %p397 = pneg %p117
        %p398 = pneg %p141
        %p399 = pneg %p138
        %p400 = pneg %p162
        %p401 = pneg %p159
        %p402 = pneg %p183
        %p403 = pneg %p180
        %p404 = pneg %p204
        %p405 = pneg %p201
        %p406 = pneg %p225
        %p407 = pneg %p222
        %p408 = pneg %p246
        %p409 = pneg %p243
        %p410 = pneg %p267
        %p411 = pneg %p264
        %p412 = pneg %p293
        %p413 = pneg %p290
        %s414 = sand.u32 %s280, 1
        %s415 = scalar_lea.sflag [#allocation4], %s414
        %s416 = sand.u32 %s280, 1
        %s417 = smul.addr %s416, 8
        %s418 = scalar_lea.vmem [#allocation5], %s417
        %p419 = scmp.lt.s32.totalorder %s26, 1
        %s420 = scalar_select %p419, %s26, 1
        %s421 = smul.addr %s420, 8
        %s422 = scalar_lea.vmem %s0, %s421
        %p423 = scmp.lt.s32.totalorder %s26, 1
        %s424 = scalar_select %p423, %s26, 1
        %s425 = smul.addr %s424, 8
        %s426 = scalar_lea.vmem %s1, %s425
        %p427 = scmp.lt.s32.totalorder %s26, 1
        %s428 = scalar_select %p427, %s26, 1
        %s429 = smul.addr %s428, 8
        %s430 = scalar_lea.vmem %s2, %s429
        %v432 = vld [vmem:[%s422] sm:$0xff]
        %v433 = vpack.c.bf16 %v432, %v432
        %v434 = vld [vmem:[%s426] sm:$0xff]
        %v435 = vpack.c.bf16 %v434, %v434
        %v436 = vld [vmem:[%s430] sm:$0xff]
        %v437 = vpack.c.bf16 %v436, %v436
        %v438 = vld [vmem:[%s3] sm:$0x7]
        %v439 = vld [vmem:[%s4] sm:$0x3]
        %vm440 = vcmask 23552
        %v442 = vsel %vm440, %v435, 0
        %vm444 = vcmask 1040384
        %vm445 = vcmask 1041408
        %v446 = vsel %vm444, 4294967295, 65535
        %v447 = vsel %vm445, %v446, 0
        %v449 = vand.u32 %v439, %v447
        %451 = vmatprep.subr.bf16.mxu0 0
        %452 = vmatpush1.bf16.msra.mxu0 %v449
        %453 = vmatprep.subr.bf16.mxu0 0
        %454 = vmatpush1.bf16.msra.mxu0 0
        %455 = vmatprep.subr.bf16.mxu0 0
        %456 = vmatpush1.bf16.msra.mxu0 0
        %457 = vmatprep.subr.bf16.mxu0 0
        %458 = vmatpush1.bf16.msra.mxu0 0
        %459 = vmatprep.subr.bf16.mxu0 0
        %460 = vmatpush1.bf16.msra.mxu0 0
        %461 = vmatprep.subr.bf16.mxu0 0
        %462 = vmatpush1.bf16.msra.mxu0 0
        %463 = vmatprep.subr.bf16.mxu0 0
        %464 = vmatpush1.bf16.msra.mxu0 0
        %465 = vmatprep.subr.bf16.mxu0 0
        %466 = vmatpush1.bf16.msra.mxu0 0
        %467 = vmatprep.subr.bf16.mxu0 0
        %468 = vmatpush1.bf16.msra.mxu0 0
        %469 = vmatprep.subr.bf16.mxu0 0
        %470 = vmatpush1.bf16.msra.mxu0 0
        %471 = vmatprep.subr.bf16.mxu0 0
        %472 = vmatpush1.bf16.msra.mxu0 0
        %473 = vmatprep.subr.bf16.mxu0 0
        %474 = vmatpush1.bf16.msra.mxu0 0
        %475 = vmatprep.subr.bf16.mxu0 0
        %476 = vmatpush1.bf16.msra.mxu0 0
        %477 = vmatprep.subr.bf16.mxu0 0
        %478 = vmatpush1.bf16.msra.mxu0 0
        %479 = vmatprep.subr.bf16.mxu0 0
        %480 = vmatpush1.bf16.msra.mxu0 0
        %481 = vmatprep.subr.bf16.mxu0 0
        %482 = vmatpush1.bf16.msra.mxu0 0
        %483 = vmatprep.mubr.bf16.mxu0 0
        %484 = vmatmul.mubr.bf16.gmra.mrb[0].mxu0 %v442
        %v485 = vpop.f32.mrb[0].mxu0
        %v486 = vadd.f32 0.0, %v485
        %v487 = vpop.f32.mrb[0].mxu0
        %v488 = vpop.f32.mrb[0].mxu0
        %v489 = vpop.f32.mrb[0].mxu0
        %490 = vdwg.mxu0
        %vm491 = vcmask 48128
        %v493 = vsel %vm491, %v433, 0
        %vm495 = vcmask 1042432
        %v497 = vsel %vm495, %v438, 0
        %499 = vmatprep.subr.bf16.mxu0 0
        %500 = vmatpush1.bf16.msra.mxu0 %v497
        %501 = vmatprep.subr.bf16.mxu0 0
        %502 = vmatpush1.bf16.msra.mxu0 0
        %503 = vmatprep.subr.bf16.mxu0 0
        %504 = vmatpush1.bf16.msra.mxu0 0
        %505 = vmatprep.subr.bf16.mxu0 0
        %506 = vmatpush1.bf16.msra.mxu0 0
        %507 = vmatprep.subr.bf16.mxu0 0
        %508 = vmatpush1.bf16.msra.mxu0 0
        %509 = vmatprep.subr.bf16.mxu0 0
        %510 = vmatpush1.bf16.msra.mxu0 0
        %511 = vmatprep.subr.bf16.mxu0 0
        %512 = vmatpush1.bf16.msra.mxu0 0
        %513 = vmatprep.subr.bf16.mxu0 0
        %514 = vmatpush1.bf16.msra.mxu0 0
        %515 = vmatprep.subr.bf16.mxu0 0
        %516 = vmatpush1.bf16.msra.mxu0 0
        %517 = vmatprep.subr.bf16.mxu0 0
        %518 = vmatpush1.bf16.msra.mxu0 0
        %519 = vmatprep.subr.bf16.mxu0 0
        %520 = vmatpush1.bf16.msra.mxu0 0
        %521 = vmatprep.subr.bf16.mxu0 0
        %522 = vmatpush1.bf16.msra.mxu0 0
        %523 = vmatprep.subr.bf16.mxu0 0
        %524 = vmatpush1.bf16.msra.mxu0 0
        %525 = vmatprep.subr.bf16.mxu0 0
        %526 = vmatpush1.bf16.msra.mxu0 0
        %527 = vmatprep.subr.bf16.mxu0 0
        %528 = vmatpush1.bf16.msra.mxu0 0
        %529 = vmatprep.subr.bf16.mxu0 0
        %530 = vmatpush1.bf16.msra.mxu0 0
        %531 = vmatprep.mubr.bf16.mxu0 0
        %532 = vmatmul.mubr.bf16.gmra.mrb[0].mxu0 %v493
        %v533 = vpop.f32.mrb[0].mxu0
        %v534 = vadd.f32 %v486, %v533
        %v535 = vpop.f32.mrb[0].mxu0
        %v536 = vpop.f32.mrb[0].mxu0
        %v537 = vpop.f32.mrb[0].mxu0
        %538 = vdwg.mxu0
        %v539 = vld [vmem:[%s5] sm:$0xf]
        %vm540 = vcmask 64512
        %v542 = vsel %vm540, %v437, 0
        %vm544 = vcmask 1043456
        %v546 = vsel %vm544, %v539, 0
        %548 = vmatprep.subr.bf16.mxu0 0
        %549 = vmatpush1.bf16.msra.mxu0 %v546
        %550 = vmatprep.subr.bf16.mxu0 0
        %551 = vmatpush1.bf16.msra.mxu0 0
        %552 = vmatprep.subr.bf16.mxu0 0
        %553 = vmatpush1.bf16.msra.mxu0 0
        %554 = vmatprep.subr.bf16.mxu0 0
        %555 = vmatpush1.bf16.msra.mxu0 0
        %556 = vmatprep.subr.bf16.mxu0 0
        %557 = vmatpush1.bf16.msra.mxu0 0
        %558 = vmatprep.subr.bf16.mxu0 0
        %559 = vmatpush1.bf16.msra.mxu0 0
        %560 = vmatprep.subr.bf16.mxu0 0
        %561 = vmatpush1.bf16.msra.mxu0 0
        %562 = vmatprep.subr.bf16.mxu0 0
        %563 = vmatpush1.bf16.msra.mxu0 0
        %564 = vmatprep.subr.bf16.mxu0 0
        %565 = vmatpush1.bf16.msra.mxu0 0
        %566 = vmatprep.subr.bf16.mxu0 0
        %567 = vmatpush1.bf16.msra.mxu0 0
        %568 = vmatprep.subr.bf16.mxu0 0
        %569 = vmatpush1.bf16.msra.mxu0 0
        %570 = vmatprep.subr.bf16.mxu0 0
        %571 = vmatpush1.bf16.msra.mxu0 0
        %572 = vmatprep.subr.bf16.mxu0 0
        %573 = vmatpush1.bf16.msra.mxu0 0
        %574 = vmatprep.subr.bf16.mxu0 0
        %575 = vmatpush1.bf16.msra.mxu0 0
        %576 = vmatprep.subr.bf16.mxu0 0
        %577 = vmatpush1.bf16.msra.mxu0 0
        %578 = vmatprep.subr.bf16.mxu0 0
        %579 = vmatpush1.bf16.msra.mxu0 0
        %580 = vmatprep.mubr.bf16.mxu0 0
        %581 = vmatmul.mubr.bf16.gmra.mrb[0].mxu0 %v542
        %v582 = vpop.f32.mrb[0].mxu0
        %v583 = vadd.f32 0.0, %v582
        %v584 = vpop.f32.mrb[0].mxu0
        %v585 = vpop.f32.mrb[0].mxu0
        %v586 = vpop.f32.mrb[0].mxu0
        %587 = vdwg.mxu0
        %v588 = vadd.f32 %v534, %v583
        %v589 = vld [vmem:[%s6] sm:$0x1]
        %v591 = vlaneseq
        %v592 = vshrl.u32 %v591, 7
        %v593 = vsub.s32 0, %v592
        %v594 = vrot.slane %v589, %v593
        %v596 = vadd.f32 %v588, %v594
        %v597 = vmax.f32 %v596, 0.0
        %v598 = vpack.c.bf16 %v597, %v597
        %v599 = vld [vmem:[%s7] sm:$0xf]
        %v600 = vld [vmem:[%s7 + $0x4] sm:$0xf]
        %v601 = vld [vmem:[%s7 + $0x8] sm:$0xf]
        %v602 = vld [vmem:[%s7 + $0xc] sm:$0xf]
        %v603 = vld [vmem:[%s7 + $0x10] sm:$0xf]
        %v604 = vld [vmem:[%s7 + $0x14] sm:$0xf]
        %v605 = vld [vmem:[%s7 + $0x18] sm:$0xf]
        %v606 = vld [vmem:[%s7 + $0x1c] sm:$0xf]
        %v607 = vld [vmem:[%s7 + $0x20] sm:$0xf]
        %v608 = vld [vmem:[%s7 + $0x24] sm:$0xf]
        %v609 = vld [vmem:[%s7 + $0x28] sm:$0xf]
        %v610 = vld [vmem:[%s7 + $0x2c] sm:$0xf]
        %v611 = vld [vmem:[%s7 + $0x30] sm:$0xf]
        %v612 = vld [vmem:[%s7 + $0x34] sm:$0xf]
        %v613 = vld [vmem:[%s7 + $0x38] sm:$0xf]
        %v614 = vld [vmem:[%s7 + $0x3c] sm:$0xf]
        %v615 = vld [vmem:[%s8] sm:$0x1]
        %v617 = vlaneseq
        %v618 = vshrl.u32 %v617, 7
        %v619 = vsub.s32 0, %v618
        %v620 = vrot.slane %v615, %v619
        %v638 = vunpack.c.l.b16 %v599
        %v639 = vunpack.c.l.b16 %v600
        %v640 = vunpack.c.l.b16 %v601
        %v641 = vunpack.c.l.b16 %v602
        %v642 = vunpack.c.l.b16 %v603
        %v643 = vunpack.c.l.b16 %v604
        %v644 = vunpack.c.l.b16 %v605
        %v645 = vunpack.c.l.b16 %v606
        %v646 = vunpack.c.l.b16 %v607
        %v647 = vunpack.c.l.b16 %v608
        %v648 = vunpack.c.l.b16 %v609
        %v649 = vunpack.c.l.b16 %v610
        %v650 = vunpack.c.l.b16 %v611
        %v651 = vunpack.c.l.b16 %v612
        %v652 = vunpack.c.l.b16 %v613
        %v653 = vunpack.c.l.b16 %v614
        %v654 = vpack.c.b16 %v639, %v638
        %v655 = vpack.c.b16 %v641, %v640
        %v656 = vpack.c.b16 %v643, %v642
        %v657 = vpack.c.b16 %v645, %v644
        %v658 = vpack.c.b16 %v647, %v646
        %v659 = vpack.c.b16 %v649, %v648
        %v660 = vpack.c.b16 %v651, %v650
        %v661 = vpack.c.b16 %v653, %v652
        %670 = vmatprep.subr.bf16.mxu0 0
        %671 = vmatpush1.bf16.msra.mxu0 %v654
        %672 = vmatprep.subr.bf16.mxu0 0
        %673 = vmatpush1.bf16.msra.mxu0 %v655
        %674 = vmatprep.subr.bf16.mxu0 0
        %675 = vmatpush1.bf16.msra.mxu0 %v656
        %676 = vmatprep.subr.bf16.mxu0 0
        %677 = vmatpush1.bf16.msra.mxu0 %v657
        %678 = vmatprep.subr.bf16.mxu0 0
        %679 = vmatpush1.bf16.msra.mxu0 %v658
        %680 = vmatprep.subr.bf16.mxu0 0
        %681 = vmatpush1.bf16.msra.mxu0 %v659
        %682 = vmatprep.subr.bf16.mxu0 0
        %683 = vmatpush1.bf16.msra.mxu0 %v660
        %684 = vmatprep.subr.bf16.mxu0 0
        %685 = vmatpush1.bf16.msra.mxu0 %v661
        %686 = vmatprep.subr.bf16.mxu0 0
        %687 = vmatpush1.bf16.msra.mxu0 0
        %688 = vmatprep.subr.bf16.mxu0 0
        %689 = vmatpush1.bf16.msra.mxu0 0
        %690 = vmatprep.subr.bf16.mxu0 0
        %691 = vmatpush1.bf16.msra.mxu0 0
        %692 = vmatprep.subr.bf16.mxu0 0
        %693 = vmatpush1.bf16.msra.mxu0 0
        %694 = vmatprep.subr.bf16.mxu0 0
        %695 = vmatpush1.bf16.msra.mxu0 0
        %696 = vmatprep.subr.bf16.mxu0 0
        %697 = vmatpush1.bf16.msra.mxu0 0
        %698 = vmatprep.subr.bf16.mxu0 0
        %699 = vmatpush1.bf16.msra.mxu0 0
        %700 = vmatprep.subr.bf16.mxu0 0
        %701 = vmatpush1.bf16.msra.mxu0 0
        %702 = vmatprep.mubr.bf16.mxu0 0
        %703 = vmatmul.mubr.bf16.gmra.mrb[0].mxu0 %v598
        %v704 = vpop.f32.mrb[0].mxu0
        %v705 = vadd.f32 %v620, %v704
        %v706 = vpop.f32.mrb[0].mxu0
        %v707 = vpop.f32.mrb[0].mxu0
        %v708 = vpop.f32.mrb[0].mxu0
        %709 = vdwg.mxu0
        %v710 = vmax.f32 %v705, 0.0
        %v711 = vpack.c.bf16 %v710, %v710
        %v712 = vld [vmem:[#allocation2] sm:$0xf]
        %v713 = vld [vmem:[#allocation2 + $0x4] sm:$0xf]
        %v714 = vld [vmem:[#allocation2 + $0x8] sm:$0xf]
        %v715 = vld [vmem:[#allocation2 + $0xc] sm:$0xf]
        %v716 = vld [vmem:[#allocation2 + $0x10] sm:$0xf]
        %v717 = vld [vmem:[#allocation2 + $0x14] sm:$0xf]
        %v718 = vld [vmem:[#allocation2 + $0x18] sm:$0xf]
        %v719 = vld [vmem:[#allocation2 + $0x1c] sm:$0xf]
        %v720 = vld [vmem:[#allocation2 + $0x20] sm:$0xf]
        %v721 = vld [vmem:[#allocation2 + $0x24] sm:$0xf]
        %v722 = vld [vmem:[#allocation2 + $0x28] sm:$0xf]
        %v723 = vld [vmem:[#allocation2 + $0x2c] sm:$0xf]
        %v724 = vld [vmem:[#allocation2 + $0x30] sm:$0xf]
        %v725 = vld [vmem:[#allocation2 + $0x34] sm:$0xf]
        %v726 = vld [vmem:[#allocation2 + $0x38] sm:$0xf]
        %v727 = vld [vmem:[#allocation2 + $0x3c] sm:$0xf]
        %v728 = vld [vmem:[%s10] sm:$0x1]
        %v730 = vlaneseq
        %v731 = vshrl.u32 %v730, 7
        %v732 = vsub.s32 0, %v731
        %v733 = vrot.slane %v728, %v732
        %v751 = vunpack.c.l.b16 %v712
        %v752 = vunpack.c.l.b16 %v713
        %v753 = vunpack.c.l.b16 %v714
        %v754 = vunpack.c.l.b16 %v715
        %v755 = vunpack.c.l.b16 %v716
        %v756 = vunpack.c.l.b16 %v717
        %v757 = vunpack.c.l.b16 %v718
        %v758 = vunpack.c.l.b16 %v719
        %v759 = vunpack.c.l.b16 %v720
        %v760 = vunpack.c.l.b16 %v721
        %v761 = vunpack.c.l.b16 %v722
        %v762 = vunpack.c.l.b16 %v723
        %v763 = vunpack.c.l.b16 %v724
        %v764 = vunpack.c.l.b16 %v725
        %v765 = vunpack.c.l.b16 %v726
        %v766 = vunpack.c.l.b16 %v727
        %v767 = vpack.c.b16 %v752, %v751
        %v768 = vpack.c.b16 %v754, %v753
        %v769 = vpack.c.b16 %v756, %v755
        %v770 = vpack.c.b16 %v758, %v757
        %v771 = vpack.c.b16 %v760, %v759
        %v772 = vpack.c.b16 %v762, %v761
        %v773 = vpack.c.b16 %v764, %v763
        %v774 = vpack.c.b16 %v766, %v765
        %783 = vmatprep.subr.bf16.mxu0 0
        %784 = vmatpush1.bf16.msra.mxu0 %v767
        %785 = vmatprep.subr.bf16.mxu0 0
        %786 = vmatpush1.bf16.msra.mxu0 %v768
        %787 = vmatprep.subr.bf16.mxu0 0
        %788 = vmatpush1.bf16.msra.mxu0 %v769
        %789 = vmatprep.subr.bf16.mxu0 0
        %790 = vmatpush1.bf16.msra.mxu0 %v770
        %791 = vmatprep.subr.bf16.mxu0 0
        %792 = vmatpush1.bf16.msra.mxu0 %v771
        %793 = vmatprep.subr.bf16.mxu0 0
        %794 = vmatpush1.bf16.msra.mxu0 %v772
        %795 = vmatprep.subr.bf16.mxu0 0
        %796 = vmatpush1.bf16.msra.mxu0 %v773
        %797 = vmatprep.subr.bf16.mxu0 0
        %798 = vmatpush1.bf16.msra.mxu0 %v774
        %799 = vmatprep.subr.bf16.mxu0 0
        %800 = vmatpush1.bf16.msra.mxu0 0
        %801 = vmatprep.subr.bf16.mxu0 0
        %802 = vmatpush1.bf16.msra.mxu0 0
        %803 = vmatprep.subr.bf16.mxu0 0
        %804 = vmatpush1.bf16.msra.mxu0 0
        %805 = vmatprep.subr.bf16.mxu0 0
        %806 = vmatpush1.bf16.msra.mxu0 0
        %807 = vmatprep.subr.bf16.mxu0 0
        %808 = vmatpush1.bf16.msra.mxu0 0
        %809 = vmatprep.subr.bf16.mxu0 0
        %810 = vmatpush1.bf16.msra.mxu0 0
        %811 = vmatprep.subr.bf16.mxu0 0
        %812 = vmatpush1.bf16.msra.mxu0 0
        %813 = vmatprep.subr.bf16.mxu0 0
        %814 = vmatpush1.bf16.msra.mxu0 0
        %815 = vmatprep.mubr.bf16.mxu0 0
        %816 = vmatmul.mubr.bf16.gmra.mrb[0].mxu0 %v711
        %v817 = vpop.f32.mrb[0].mxu0
        %v818 = vadd.f32 %v733, %v817
        %v819 = vpop.f32.mrb[0].mxu0
        %v820 = vpop.f32.mrb[0].mxu0
        %v821 = vpop.f32.mrb[0].mxu0
        %822 = vdwg.mxu0
        %823 = vst [vmem:[%s418] sm:$0xff] %v818
        %s824 = sand.u32 %s280, 1
        %s825 = scalar_lea.sflag [#allocation4], %s824
        %s826 = sand.u32 %s280, 1
        %s827 = smul.addr %s826, 8
        %s828 = scalar_lea.vmem [#allocation5], %s827
        // Predicated region
        $region69: #{tpu_custom_call.1} parent=63 // pred_check
          %p829 = pneg %p290
        $region70: #{tpu_custom_call.1} parent=63 // pred_check_branch
          %831 = sbr.rel (%p829) target = $region72
        $region71: #{tpu_custom_call.1} parent=63 // pred_region
          %s833 = ssub.s32 128, 128
          %834 = vsyncadd %s825, %s833
          %s835 = smul.addr %s26, 128
          %s836 = scalar_lea.hbm %s11, %s835
          %s838 = sshll.u32 %s828, 4
          %s839 = int_to_ptr.vmem [resolvable:$true] %s838
          %841 = dma.vmem_to_hbm [thread:$0]  %s839, 128, %s836, %s825
        $region72: #{tpu_custom_call.1} parent=63 // pred_fallthru
          _
      $region64: #{tpu_custom_call.1} parent=5 // pred_fallthru
        _
      %p842 = scmp.le.s32.totalorder 2, %s21
      // Predicated region
      $region73: #{tpu_custom_call.1} parent=5 // pred_check
        %p843 = pneg %p842
      $region74: #{tpu_custom_call.1} parent=5 // pred_check_branch
        %845 = sbr.rel (%p843) target = $region76
      $region75: #{tpu_custom_call.1} parent=5 // pred_region
        %s846 = ssub.s32 %s21, 2
        // Predicated region
        $region77: #{tpu_custom_call.1} parent=75 // pred_check
          %p847 = pneg %p296
        $region78: #{tpu_custom_call.1} parent=75 // pred_check_branch
          %849 = sbr.rel (%p847) target = $region80
        $region79: #{tpu_custom_call.1} parent=75 // pred_region
          %s850 = sand.u32 %s281, 1
          %s851 = scalar_lea.sflag [#allocation4], %s850
          %s852 = sand.u32 %s281, 1
          %s853 = smul.addr %s852, 8
          %s854 = scalar_lea.vmem [#allocation5], %s853
          %855 = dma.done %s851, 128
        $region80: #{tpu_custom_call.1} parent=75 // pred_fallthru
          _
      $region76: #{tpu_custom_call.1} parent=5 // pred_fallthru
        _
    $region6: #{tpu_custom_call.1} parent=1 // loop_footer
      %s25 = sadd.s32 1, %s21
    $region7: #{tpu_custom_call.1} parent=1 // loop_footer_branch
      %20 = sbr.rel target = $region3
    $region8: #{tpu_custom_call.1} parent=1 // loop_exit
      _
    %856 = vsyncpa [#allocation3], 1
    %s857 = scalar_lea.sflag [#allocation3], 1
    %858 = vsyncpa %s857, 1
    %859 = vsyncpa [#allocation4], 1
    %s860 = scalar_lea.sflag [#allocation4], 1
    %861 = vsyncpa %s860, 1

</llo_original>
